<compile_context>
chip_gen: v7x
topology: tpu7x:2x2x1
jax: 0.10.0
libtpu: 0.0.40
codegen_flags: <defaults>
</compile_context>

<pallas_src>
import jax
import jax.numpy as jnp
from jax.experimental import pallas as pl
from jax.experimental.pallas import tpu as pltpu


def _round_up(x, m):
    return ((x + m - 1) // m) * m


def _accumulate_target_logp(inp_ref, tgt_ref, acc_ref):
    """acc[r, 0] += input[r, v] where global v == target[r] (one-hot select)."""
    k = pl.program_id(1)

    @pl.when(k == 0)
    def _():
        acc_ref[...] = jnp.zeros_like(acc_ref)

    x = inp_ref[...].astype(jnp.float32)                 # (TR, TV)
    tr, tv = x.shape
    lane = jax.lax.broadcasted_iota(jnp.int32, (tr, tv), 1) + k * tv
    sel = jnp.where(lane == tgt_ref[...], x, 0.0)        # gather via select, no scatter
    acc_ref[...] += jnp.sum(sel, axis=1, keepdims=True)  # (TR, 1)


def _lm_crit_kernel_mean(inp_ref, tgt_ref, msk_ref,
                         loss_part_ref, mask_part_ref, acc_ref):
    _accumulate_target_logp(inp_ref, tgt_ref, acc_ref)

    @pl.when(pl.program_id(1) == pl.num_programs(1) - 1)
    def _():
        msk = msk_ref[...]                               # (TR, 1) f32
        row_loss = -acc_ref[...] * msk                   # (TR, 1)
        loss_part_ref[...] = jnp.sum(row_loss, keepdims=True)   # (1, 1)
        mask_part_ref[...] = jnp.sum(msk, keepdims=True)        # (1, 1)


def _lm_crit_kernel_none(inp_ref, tgt_ref, msk_ref, row_loss_ref, acc_ref):
    _accumulate_target_logp(inp_ref, tgt_ref, acc_ref)

    @pl.when(pl.program_id(1) == pl.num_programs(1) - 1)
    def _():
        row_loss_ref[...] = -acc_ref[...] * msk_ref[...]


def language_model_criterion(inp, target, mask, *, reduction="mean",
                             tr_cap=256, tv_cap=2048):
    """inp: (N, L, V) log-probs; target/mask: (N, >=L) (or 3-D, flattened like the module)."""
    if target.ndim == 3:
        target = target.reshape(-1, target.shape[2])
        mask = mask.reshape(-1, mask.shape[2])
    N, L, V = inp.shape
    target = target[:, :L]
    mask = mask[:, :L]

    R = N * L
    x = inp.reshape(R, V)                                # native dtype, no HBM copy
    t = target.reshape(R, 1).astype(jnp.int32)
    m = mask.reshape(R, 1).astype(jnp.float32)

    # Row tiling: big tiles to amortize per-step overhead, but never pad tiny inputs up to 256.
    TR = min(tr_cap, _round_up(R, 8))
    Rp = _round_up(R, TR)
    # Vocab tiling: single full-width tile when it fits, else 128-aligned chunks.
    if V <= tv_cap:
        TV, Vp = V, V
    else:
        TV = _round_up(tv_cap, 128)
        Vp = _round_up(V, TV)

    if Rp != R or Vp != V:
        x = jnp.pad(x, ((0, Rp - R), (0, Vp - V)))       # padded lanes never match a target
    if Rp != R:
        t = jnp.pad(t, ((0, Rp - R), (0, 0)))
        m = jnp.pad(m, ((0, Rp - R), (0, 0)))            # padded rows have mask == 0

    nR, nV = Rp // TR, Vp // TV
    grid = (nR, nV)

    in_specs = [
        pl.BlockSpec((TR, TV), lambda i, k: (i, k)),
        pl.BlockSpec((TR, 1), lambda i, k: (i, 0)),
        pl.BlockSpec((TR, 1), lambda i, k: (i, 0)),
    ]
    scratch = [pltpu.VMEM((TR, 1), jnp.float32)]
    cparams = pltpu.CompilerParams(
        dimension_semantics=("parallel", "arbitrary"))   # rows megacore-shardable (v7x)

    if reduction == "none":
        row_loss = pl.pallas_call(
            _lm_crit_kernel_none,
            out_shape=jax.ShapeDtypeStruct((Rp, 1), jnp.float32),
            grid_spec=pltpu.PrefetchScalarGridSpec(
                num_scalar_prefetch=0,
                grid=grid,
                in_specs=in_specs,
                out_specs=pl.BlockSpec((TR, 1), lambda i, k: (i, 0)),
                scratch_shapes=scratch),
            compiler_params=cparams,
        )(x, t, m)
        per_row = row_loss[:R, 0].reshape(N, L)
        msum = mask.astype(jnp.float32).reshape(N, L).sum(axis=1)
        return (per_row.sum(axis=1) / msum).astype(inp.dtype)

    # reduction == 'mean' (default): only tiny per-row-tile partial sums are emitted.
    loss_part, mask_part = pl.pallas_call(
        _lm_crit_kernel_mean,
        out_shape=(jax.ShapeDtypeStruct((nR, 1, 1), jnp.float32),
                   jax.ShapeDtypeStruct((nR, 1, 1), jnp.float32)),
        grid_spec=pltpu.PrefetchScalarGridSpec(
            num_scalar_prefetch=0,
            grid=grid,
            in_specs=in_specs,
            out_specs=(
                pl.BlockSpec((None, 1, 1), lambda i, k: (i, 0, 0)),
                pl.BlockSpec((None, 1, 1), lambda i, k: (i, 0, 0)),
            ),
            scratch_shapes=scratch),
        compiler_params=cparams,
    )(x, t, m)
    return (jnp.sum(loss_part) / jnp.sum(mask_part)).astype(inp.dtype)


def _reference(inp, target, mask, reduction="mean"):
    """Pure-JAX mirror of the PyTorch forward."""
    N, L, V = inp.shape
    t = target[:, :L].astype(jnp.int32)
    m = mask[:, :L].astype(jnp.float32)
    g = jnp.take_along_axis(inp.astype(jnp.float32), t[..., None], axis=2)[..., 0]
    out = -g * m
    if reduction == "none":
        return out.sum(axis=1) / m.sum(axis=1)
    return out.sum() / m.sum()


if __name__ == "__main__":
    key = jax.random.PRNGKey(0)

    # Small shape consistent with the module: batch=2, seq=8, vocab=32.
    N, L, V = 2, 8, 32
    k1, k2, k3, k4 = jax.random.split(key, 4)
    logits = jax.random.normal(k1, (N, L, V), dtype=jnp.float32)
    log_probs = jax.nn.log_softmax(logits, axis=-1)
    target = jax.random.randint(k2, (N, L), 0, V, dtype=jnp.int32)
    mask = (jnp.arange(L)[None, :] < jnp.array([[L], [L - 2]])).astype(jnp.float32)

    out_mean = language_model_criterion(log_probs, target, mask, reduction="mean")
    out_none = language_model_criterion(log_probs, target, mask, reduction="none")
    jax.block_until_ready((out_mean, out_none))

    assert jnp.allclose(out_mean, _reference(log_probs, target, mask, "mean"),
                        atol=1e-5, rtol=1e-5)
    assert jnp.allclose(out_none, _reference(log_probs, target, mask, "none"),
                        atol=1e-5, rtol=1e-5)

    # Second (still small) case exercising multiple row tiles, vocab chunks and padding.
    N2, L2, V2 = 3, 5, 320
    lp2 = jax.nn.log_softmax(jax.random.normal(k3, (N2, L2, V2), dtype=jnp.float32), axis=-1)
    tgt2 = jax.random.randint(k4, (N2, L2), 0, V2, dtype=jnp.int32)
    msk2 = (jnp.arange(L2)[None, :] < jnp.array([[L2], [L2 - 1], [L2 - 2]])).astype(jnp.float32)

    out2_mean = language_model_criterion(lp2, tgt2, msk2, reduction="mean",
                                         tr_cap=8, tv_cap=128)
    out2_none = language_model_criterion(lp2, tgt2, msk2, reduction="none",
                                         tr_cap=8, tv_cap=128)
    jax.block_until_ready((out2_mean, out2_none))

    assert jnp.allclose(out2_mean, _reference(lp2, tgt2, msk2, "mean"), atol=1e-5, rtol=1e-5)
    assert jnp.allclose(out2_none, _reference(lp2, tgt2, msk2, "none"), atol=1e-5, rtol=1e-5)

    print("KERNEL_OK")
</pallas_src>

<mosaic_0001>
module attributes {stable_mosaic.version = 11 : i64} {
  func.func @_lm_crit_kernel_mean(%arg0: i32, %arg1: i32, %arg2: memref<16x32xf32, #tpu.memory_space<vmem>>, %arg3: memref<16x1xi32, #tpu.memory_space<vmem>>, %arg4: memref<16x1xf32, #tpu.memory_space<vmem>>, %arg5: memref<1x1x1xf32, #tpu.memory_space<vmem>>, %arg6: memref<1x1x1xf32, #tpu.memory_space<vmem>>, %arg7: memref<16x1xf32, #tpu.memory_space<vmem>>) attributes {dimension_semantics = [#tpu.dimension_semantics<parallel>, #tpu.dimension_semantics<arbitrary>], iteration_bounds = array<i64: 1, 1>, scalar_prefetch = 0 : i64, scratch_operands = 1 : i64, tpu.core_type = #tpu.core_type<tc>, window_params = [{transform_indices = @transform_0, window_bounds = array<i64: 16, 32>}, {transform_indices = @transform_1, window_bounds = array<i64: 16, 1>}, {transform_indices = @transform_2, window_bounds = array<i64: 16, 1>}, {transform_indices = @transform_3, window_bounds = array<i64: 1, 1, 1>}, {transform_indices = @transform_4, window_bounds = array<i64: 1, 1, 1>}]} {
    %c0_i32 = arith.constant 0 : i32
    %0 = arith.cmpi eq, %arg1, %c0_i32 : i32
    %1 = arith.extui %0 : i1 to i32
    %c0_i32_0 = arith.constant 0 : i32
    %2 = arith.cmpi ne, %1, %c0_i32_0 : i32
    scf.if %2 {
      %cst_11 = arith.constant 0.000000e+00 : f32
      %21 = vector.broadcast %cst_11 : f32 to vector<16x1xf32>
      %c0_12 = arith.constant 0 : index
      %c0_13 = arith.constant 0 : index
      %22 = vector.load %arg7[%c0_12, %c0_13] : memref<16x1xf32, #tpu.memory_space<vmem>>, vector<16x1xf32>
      tpu.vector_store %arg7[%c0_12, %c0_13], %21 {strides = array<i32>} : memref<16x1xf32, #tpu.memory_space<vmem>>, vector<16x1xf32>,
    } else {
    }
    %c0 = arith.constant 0 : index
    %c0_1 = arith.constant 0 : index
    %3 = vector.load %arg2[%c0, %c0_1] : memref<16x32xf32, #tpu.memory_space<vmem>>, vector<16x32xf32>
    %4 = tpu.iota {dimensions = array<i32: 1>} : vector<16x32xi32>
    %c32_i32 = arith.constant 32 : i32
    %5 = arith.muli %arg1, %c32_i32 : i32
    %6 = vector.broadcast %5 : i32 to vector<16x32xi32>
    %7 = arith.addi %4, %6 : vector<16x32xi32>
    %c0_2 = arith.constant 0 : index
    %c0_3 = arith.constant 0 : index
    %8 = vector.load %arg3[%c0_2, %c0_3] : memref<16x1xi32, #tpu.memory_space<vmem>>, vector<16x1xi32>
    %9 = vector.broadcast %8 : vector<16x1xi32> to vector<16x32xi32>
    %10 = arith.cmpi eq, %7, %9 : vector<16x32xi32>
    %cst = arith.constant 0.000000e+00 : f32
    %11 = vector.broadcast %cst : f32 to vector<16x32xf32>
    %12 = arith.select %10, %3, %11 : vector<16x32xi1>, vector<16x32xf32>
    %c0_4 = arith.constant 0 : index
    %c0_5 = arith.constant 0 : index
    %13 = vector.load %arg7[%c0_4, %c0_5] : memref<16x1xf32, #tpu.memory_space<vmem>>, vector<16x1xf32>
    %cst_6 = arith.constant dense<0.000000e+00> : vector<16xf32>
    %14 = vector.multi_reduction <add>, %12, %cst_6 [1] : vector<16x32xf32> to vector<16xf32>
    %15 = vector.shape_cast %14 : vector<16xf32> to vector<16x1xf32>
    %16 = arith.addf %13, %15 : vector<16x1xf32>
    %c0_7 = arith.constant 0 : index
    %c0_8 = arith.constant 0 : index
    %17 = vector.load %arg7[%c0_7, %c0_8] : memref<16x1xf32, #tpu.memory_space<vmem>>, vector<16x1xf32>
    tpu.vector_store %arg7[%c0_7, %c0_8], %16 {strides = array<i32>} : memref<16x1xf32, #tpu.memory_space<vmem>>, vector<16x1xf32>,
    %c0_i32_9 = arith.constant 0 : i32
    %18 = arith.cmpi eq, %arg1, %c0_i32_9 : i32
    %19 = arith.extui %18 : i1 to i32
    %c0_i32_10 = arith.constant 0 : i32
    %20 = arith.cmpi ne, %19, %c0_i32_10 : i32
    scf.if %20 {
      %c0_11 = arith.constant 0 : index
      %c0_12 = arith.constant 0 : index
      %21 = vector.load %arg4[%c0_11, %c0_12] : memref<16x1xf32, #tpu.memory_space<vmem>>, vector<16x1xf32>
      %c0_13 = arith.constant 0 : index
      %c0_14 = arith.constant 0 : index
      %22 = vector.load %arg7[%c0_13, %c0_14] : memref<16x1xf32, #tpu.memory_space<vmem>>, vector<16x1xf32>
      %cst_15 = arith.constant 0.000000e+00 : f32
      %23 = vector.broadcast %cst_15 : f32 to vector<16x1xf32>
      %24 = arith.subf %23, %22 : vector<16x1xf32>
      %25 = arith.mulf %24, %21 : vector<16x1xf32>
      %26 = vector.shape_cast %25 : vector<16x1xf32> to vector<1x16x1xf32>
      %cst_16 = arith.constant dense<0.000000e+00> : vector<1xf32>
      %27 = vector.multi_reduction <add>, %26, %cst_16 [1, 2] : vector<1x16x1xf32> to vector<1xf32>
      %28 = vector.shape_cast %27 : vector<1xf32> to vector<1x1x1xf32>
      %29 = vector.extract %28[0, 0, 0] : f32 from vector<1x1x1xf32>
      %30 = vector.broadcast %29 : f32 to vector<1x1xf32>
      %c0_17 = arith.constant 0 : index
      %c0_18 = arith.constant 0 : index
      %c0_19 = arith.constant 0 : index
      %31 = vector.load %arg5[%c0_17, %c0_18, %c0_19] : memref<1x1x1xf32, #tpu.memory_space<vmem>>, vector<1x1x1xf32>
      %32 = vector.shape_cast %31 : vector<1x1x1xf32> to vector<1x1xf32>
      %33 = vector.shape_cast %30 : vector<1x1xf32> to vector<1x1x1xf32>
      tpu.vector_store %arg5[%c0_17, %c0_18, %c0_19], %33 {strides = array<i32>} : memref<1x1x1xf32, #tpu.memory_space<vmem>>, vector<1x1x1xf32>,
      %34 = vector.shape_cast %21 : vector<16x1xf32> to vector<1x16x1xf32>
      %cst_20 = arith.constant dense<0.000000e+00> : vector<1xf32>
      %35 = vector.multi_reduction <add>, %34, %cst_20 [1, 2] : vector<1x16x1xf32> to vector<1xf32>
      %36 = vector.shape_cast %35 : vector<1xf32> to vector<1x1x1xf32>
      %37 = vector.extract %36[0, 0, 0] : f32 from vector<1x1x1xf32>
      %38 = vector.broadcast %37 : f32 to vector<1x1xf32>
      %c0_21 = arith.constant 0 : index
      %c0_22 = arith.constant 0 : index
      %c0_23 = arith.constant 0 : index
      %39 = vector.load %arg6[%c0_21, %c0_22, %c0_23] : memref<1x1x1xf32, #tpu.memory_space<vmem>>, vector<1x1x1xf32>
      %40 = vector.shape_cast %39 : vector<1x1x1xf32> to vector<1x1xf32>
      %41 = vector.shape_cast %38 : vector<1x1xf32> to vector<1x1x1xf32>
      tpu.vector_store %arg6[%c0_21, %c0_22, %c0_23], %41 {strides = array<i32>} : memref<1x1x1xf32, #tpu.memory_space<vmem>>, vector<1x1x1xf32>,
    } else {
    }
    return
  }
  func.func @transform_0(%arg0: i32, %arg1: i32) -> (i32, i32) {
    %c0_i32 = arith.constant 0 : i32
    return %arg0, %arg1 : i32, i32
  }
  func.func @transform_1(%arg0: i32, %arg1: i32) -> (i32, i32) {
    %c0_i32 = arith.constant 0 : i32
    %c0_i32_0 = arith.constant 0 : i32
    return %arg0, %c0_i32 : i32, i32
  }
  func.func @transform_2(%arg0: i32, %arg1: i32) -> (i32, i32) {
    %c0_i32 = arith.constant 0 : i32
    %c0_i32_0 = arith.constant 0 : i32
    return %arg0, %c0_i32 : i32, i32
  }
  func.func @transform_3(%arg0: i32, %arg1: i32) -> (i32, i32, i32) {
    %c0_i32 = arith.constant 0 : i32
    %c0_i32_0 = arith.constant 0 : i32
    %c0_i32_1 = arith.constant 0 : i32
    return %arg0, %c0_i32, %c0_i32_0 : i32, i32, i32
  }
  func.func @transform_4(%arg0: i32, %arg1: i32) -> (i32, i32, i32) {
    %c0_i32 = arith.constant 0 : i32
    %c0_i32_0 = arith.constant 0 : i32
    %c0_i32_1 = arith.constant 0 : i32
    return %arg0, %c0_i32, %c0_i32_0 : i32, i32, i32
  }
}

</mosaic_0001>

<llo_original>
// kernel: tpu_custom_call.1
$region0: #{tpu_custom_call.1}
  #allocation0 [shape = 'u32[]', space=smem, size = 0x4, offset = 0x4, fixed_abs, tag = 'smem constant byte address 0x4 - core index']
  #allocation1 [shape = 'u32[144,128]{1,0:T(1,128)}', space=vmem, size = 0x12000, scoped, tag = 'internal scratch']
  #allocation2 [shape = 'f32[16,1]{1,0:T(8,128)}', space=vmem, size = 0x2000, scoped, tag = 'scratch operand']
  %s0 = inlined_call_operand.vmem [shape: f32[16,32], index: 0, kind: input, shape index: {}]
  %s1 = inlined_call_operand.vmem [shape: s32[16,1], index: 1, kind: input, shape index: {}]
  %s2 = inlined_call_operand.vmem [shape: f32[16,1], index: 2, kind: input, shape index: {}]
  %s3 = inlined_call_operand.hbm [shape: f32[1,1,1], index: 3, kind: output, shape index: {0}]
  %s4 = inlined_call_operand.hbm [shape: f32[1,1,1], index: 4, kind: output, shape index: {1}]
  %5 = xla_tuple %s3, %s4
  %s6 = sld [smem:[#allocation0]]
  $region38: #{tpu_custom_call.1} parent=0
    _
  %s8 = ssub.s32 1, %s6
  %s9 = scalar_select 0, %s8, %s6
  $region1: #{tpu_custom_call.1} parent=0
    #allocation3 [shape = 'u8[512]{0}', space=vmem, size = 0x400, scoped, tag = 'output window, operand 0, single buffered']
    #allocation4 [shape = 's32[1]{0}', space=sflag, size = 0x4, scoped, tag = 'scoped memory for tpu_custom_call.1']
    #allocation5 [shape = 'u8[512]{0}', space=vmem, size = 0x400, scoped, tag = 'output window, operand 1, single buffered']
    #allocation6 [shape = 's32[1]{0}', space=sflag, size = 0x4, scoped, tag = 'scoped memory for tpu_custom_call.1']
    %10 = vsyncpa [#allocation4], 0
    %11 = vsyncpa [#allocation6], 0
    // Predicated region
    $region2: #{tpu_custom_call.1} parent=1 // pred_check
      _
    $region3: #{tpu_custom_call.1} parent=1 // pred_check_branch
      %13 = sbr.rel (0) target = $region5
    $region4: #{tpu_custom_call.1} parent=1 // pred_region
      _
    $region5: #{tpu_custom_call.1} parent=1 // pred_fallthru
      _
    // Predicated region
    $region6: #{tpu_custom_call.1} parent=1 // pred_check
      _
    $region7: #{tpu_custom_call.1} parent=1 // pred_check_branch
      %15 = sbr.rel (0) target = $region9
    $region8: #{tpu_custom_call.1} parent=1 // pred_region
      _
    $region9: #{tpu_custom_call.1} parent=1 // pred_fallthru
      _
    // Predicated region
    $region10: #{tpu_custom_call.1} parent=1 // pred_check
      _
    $region11: #{tpu_custom_call.1} parent=1 // pred_check_branch
      %17 = sbr.rel (0) target = $region13
    $region12: #{tpu_custom_call.1} parent=1 // pred_region
      _
    $region13: #{tpu_custom_call.1} parent=1 // pred_fallthru
      _
    %p18 = scmp.eq.s32.totalorder 0, 0
    // Predicated region
    $region14: #{tpu_custom_call.1} parent=1 // pred_check
      %p19 = pneg %p18
    $region15: #{tpu_custom_call.1} parent=1 // pred_check_branch
      %21 = sbr.rel (%p19) target = $region17
    $region16: #{tpu_custom_call.1} parent=1 // pred_region
      %vm22 = vcmask 7168
      %23 = vst.msk [vmem:[#allocation2] sm:$0xff] %vm22, 0.0
      %24 = vst.msk [vmem:[#allocation2 + $0x8] sm:$0xff] %vm22, 0.0
    $region17: #{tpu_custom_call.1} parent=1 // pred_fallthru
      _
    %v25 = vld [vmem:[%s0] sm:$0xff]
    %v26 = vld [vmem:[%s0 + $0x8] sm:$0xff]
    %v27 = vlaneseq
    %v28 = vand.u32 %v27, 127
    %s29 = smul.u32 0, 32
    %v30 = vstv %s29
    %v31 = vadd.s32 %v28, %v30
    %v32 = vld [vmem:[%s1] sm:$0xff]
    %v33 = vld [vmem:[%s1 + $0x8] sm:$0xff]
    %34 = vset.pattern.permute.xlu0 0
    %35 = vperm.xlu0 %34, %v32
    %v36 = vpop.permute.xlu0 %35
    %37 = vset.pattern.permute.xlu0 0
    %38 = vperm.xlu0 %37, %v33
    %v39 = vpop.permute.xlu0 %38
    %vm40 = vcmp.eq.s32.totalorder %v31, %v36
    %vm41 = vcmp.eq.s32.totalorder %v31, %v39
    %v42 = vsel %vm40, %v25, 0.0
    %v43 = vsel %vm41, %v26, 0.0
    %v44 = vld [vmem:[#allocation2] sm:$0xff]
    %v45 = vld [vmem:[#allocation2 + $0x8] sm:$0xff]
    %vm46 = vcmask 261120
    %v47 = vsel %vm46, %v42, 0.0
    %48 = vadd.xlane.f32.xlu0 %v47
    %v49 = vpop.xlane.xlu0 %48
    %v50 = vsel %vm46, %v43, 0.0
    %51 = vadd.xlane.f32.xlu0 %v50
    %v52 = vpop.xlane.xlu0 %51
    %v53 = vadd.f32 %v44, %v49
    %v54 = vadd.f32 %v45, %v52
    %vm55 = vcmask 7168
    %56 = vst.msk [vmem:[#allocation2] sm:$0xff] %vm55, %v53
    %57 = vst.msk [vmem:[#allocation2 + $0x8] sm:$0xff] %vm55, %v54
    // Predicated region
    $region18: #{tpu_custom_call.1} parent=1 // pred_check
      %p58 = pneg %p18
    $region19: #{tpu_custom_call.1} parent=1 // pred_check_branch
      %60 = sbr.rel (%p58) target = $region21
    $region20: #{tpu_custom_call.1} parent=1 // pred_region
      %v61 = vld [vmem:[%s2] sm:$0xff]
      %v62 = vld [vmem:[%s2 + $0x8] sm:$0xff]
      %v63 = vld [vmem:[#allocation2] sm:$0xff]
      %v64 = vld [vmem:[#allocation2 + $0x8] sm:$0xff]
      %v65 = vsub.f32 0.0, %v63
      %v66 = vsub.f32 0.0, %v64
      %v67 = vmul.f32 %v65, %v61
      %v68 = vmul.f32 %v66, %v62
      %v69 = vsel %vm55, %v67, 0.0
      %v70 = vsel %vm55, %v68, 0.0
      %v71 = vadd.f32 %v69, %v70
      %72 = vadd.xlane.f32.xlu0 %v71
      %v73 = vpop.xlane.xlu0 %72
      %v74 = vrot.slane %v73, 4
      %v75 = vadd.f32 %v73, %v74
      %v76 = vrot.slane %v75, 2
      %v77 = vadd.f32 %v75, %v76
      %v78 = vrot.slane %v77, 1
      %v79 = vadd.f32 %v77, %v78
      %s80 = vtos %v79
      %v81 = vstv %s80
      %vm82 = vcmask 0
      %83 = vst.msk [vmem:[#allocation3] sm:$0x1] %vm82, %v81
      %v84 = vsel %vm55, %v61, 0.0
      %v85 = vsel %vm55, %v62, 0.0
      %v86 = vadd.f32 %v84, %v85
      %87 = vadd.xlane.f32.xlu0 %v86
      %v88 = vpop.xlane.xlu0 %87
      %v89 = vrot.slane %v88, 4
      %v90 = vadd.f32 %v88, %v89
      %v91 = vrot.slane %v90, 2
      %v92 = vadd.f32 %v90, %v91
      %v93 = vrot.slane %v92, 1
      %v94 = vadd.f32 %v92, %v93
      %s95 = vtos %v94
      %v96 = vstv %s95
      %97 = vst.msk [vmem:[#allocation5] sm:$0x1] %vm82, %v96
    $region21: #{tpu_custom_call.1} parent=1 // pred_fallthru
      _
    // Predicated region
    $region22: #{tpu_custom_call.1} parent=1 // pred_check
      _
    $region23: #{tpu_custom_call.1} parent=1 // pred_check_branch
      %99 = sbr.rel (0) target = $region25
    $region24: #{tpu_custom_call.1} parent=1 // pred_region
      %s101 = ssub.s32 16, 16
      %102 = vsyncadd [#allocation4], %s101
      %s104 = sshll.u32 [#allocation3], 4
      %s105 = int_to_ptr.vmem [resolvable:$true] %s104
      %107 = dma.vmem_to_hbm [thread:$0]  %s105, 16, %s3, [#allocation4]
    $region25: #{tpu_custom_call.1} parent=1 // pred_fallthru
      _
    // Predicated region
    $region26: #{tpu_custom_call.1} parent=1 // pred_check
      _
    $region27: #{tpu_custom_call.1} parent=1 // pred_check_branch
      %109 = sbr.rel (0) target = $region29
    $region28: #{tpu_custom_call.1} parent=1 // pred_region
      %s111 = ssub.s32 16, 16
      %112 = vsyncadd [#allocation6], %s111
      %s114 = sshll.u32 [#allocation5], 4
      %s115 = int_to_ptr.vmem [resolvable:$true] %s114
      %117 = dma.vmem_to_hbm [thread:$0]  %s115, 16, %s4, [#allocation6]
    $region29: #{tpu_custom_call.1} parent=1 // pred_fallthru
      _
    // Predicated region
    $region30: #{tpu_custom_call.1} parent=1 // pred_check
      _
    $region31: #{tpu_custom_call.1} parent=1 // pred_check_branch
      %119 = sbr.rel (0) target = $region33
    $region32: #{tpu_custom_call.1} parent=1 // pred_region
      %120 = dma.done [#allocation4], 16
    $region33: #{tpu_custom_call.1} parent=1 // pred_fallthru
      _
    // Predicated region
    $region34: #{tpu_custom_call.1} parent=1 // pred_check
      _
    $region35: #{tpu_custom_call.1} parent=1 // pred_check_branch
      %122 = sbr.rel (0) target = $region37
    $region36: #{tpu_custom_call.1} parent=1 // pred_region
      %123 = dma.done [#allocation6], 16
    $region37: #{tpu_custom_call.1} parent=1 // pred_fallthru
      _
    %124 = vsyncpa [#allocation4], 1
    %125 = vsyncpa [#allocation6], 1

</llo_original>
